<compile_context>
chip_gen: v7x
topology: tpu7x:2x2x1
jax: 0.10.0
libtpu: 0.0.40
codegen_flags: <defaults>
</compile_context>

<pallas_src>
import functools

import jax
import jax.numpy as jnp
from jax.experimental import pallas as pl
from jax.experimental.pallas import tpu as pltpu


def _textrnn_kernel(x_ref, h0_ref, wih_ref, whh_ref, bih_ref, bhh_ref,
                    w_ref, b_ref, out_ref, *, seq_len, batch):
    """Single-invocation kernel: RNN recurrence over seq + final projection.

    x_ref  : (seq, batch, n_class)   VMEM   (time-major)
    h0_ref : (batch, n_hidden)       VMEM
    wih_ref: (n_class, n_hidden)     VMEM   (= W_ih^T)
    whh_ref: (n_hidden, n_hidden)    VMEM   (= W_hh^T)
    bih_ref: (1, n_hidden)           VMEM
    bhh_ref: (1, n_hidden)           VMEM
    w_ref  : (n_hidden, n_class)     VMEM
    b_ref  : (1, n_class)            VMEM
    out_ref: (batch, n_class)        VMEM
    """
    n_hidden = wih_ref.shape[1]

    # ---- hoisted work, OFF the serial h-dependency chain ------------------
    # Single fused bias, broadcast exactly once.
    bias = jnp.broadcast_to(bih_ref[...] + bhh_ref[...], (batch, n_hidden))
    wih = wih_ref[...]
    whh = whh_ref[...]
    # Per-timestep input projections are independent of h: compute them all
    # before the recurrence so the scheduler overlaps them freely with it.
    xw = [jnp.dot(x_ref[t], wih, preferred_element_type=jnp.float32) + bias
          for t in range(seq_len)]

    # ---- serial recurrence: per step only dot + add + tanh ----------------
    # (On v5e one could trade the K=n_hidden MXU dot for a short VPU
    #  expansion; kept as jnp.dot pending a bundle-dump comparison.)
    h = h0_ref[...]
    for t in range(seq_len):
        h = jnp.tanh(xw[t] + jnp.dot(h, whh, preferred_element_type=jnp.float32))

    # ---- final projection --------------------------------------------------
    out_ref[...] = (jnp.dot(h, w_ref[...], preferred_element_type=jnp.float32)
                    + b_ref[...])


@jax.jit
def textrnn_forward(X, hidden, params):
    """X: (batch, seq, n_class) float32; hidden: (1, batch, n_hidden) float32."""
    batch, seq, n_class = X.shape

    # Time-major layout (matches nn.RNN's X.transpose(0,1)); fused by XLA with
    # the surrounding jit, ~432 bytes at these shapes.
    Xt = jnp.transpose(X, (1, 0, 2))          # (seq, batch, n_class)
    h0 = hidden[0]                            # (batch, n_hidden)

    vmem = pl.BlockSpec(memory_space=pltpu.MemorySpace.VMEM)
    kernel = functools.partial(_textrnn_kernel, seq_len=seq, batch=batch)
    return pl.pallas_call(
        kernel,
        out_shape=jax.ShapeDtypeStruct((batch, n_class), jnp.float32),
        in_specs=[vmem] * 8,
        out_specs=vmem,
    )(Xt, h0,
      params["W_ih_T"], params["W_hh_T"],
      params["b_ih"], params["b_hh"],
      params["W"], params["b"])


def reference_forward(X, hidden, params):
    """Pure-JAX reference for validation."""
    Xt = jnp.transpose(X, (1, 0, 2))
    h = hidden[0]
    for t in range(Xt.shape[0]):
        h = jnp.tanh(Xt[t] @ params["W_ih_T"] + params["b_ih"]
                     + h @ params["W_hh_T"] + params["b_hh"])
    return h @ params["W"] + params["b"]


def init_params(key, n_class, n_hidden):
    ks = jax.random.split(key, 6)
    # Deterministic synthetic weights (shapes match nn.RNN / nn.Parameter).
    return {
        "W_ih_T": jax.random.normal(ks[0], (n_class, n_hidden), jnp.float32) * 0.4,
        "W_hh_T": jax.random.normal(ks[1], (n_hidden, n_hidden), jnp.float32) * 0.4,
        "b_ih":   jax.random.normal(ks[2], (1, n_hidden), jnp.float32) * 0.1,
        "b_hh":   jax.random.normal(ks[3], (1, n_hidden), jnp.float32) * 0.1,
        "W":      jax.random.normal(ks[4], (n_hidden, n_class), jnp.float32),
        "b":      jax.random.normal(ks[5], (1, n_class), jnp.float32),
    }


if __name__ == "__main__":
    sentences = ['i like dog', 'i love coffee', 'i hate milk',
                 'you like cat', 'you love milk', 'you hate coffee']
    word_list = sorted(set(' '.join(sentences).split()))
    word_dict = {w: i for i, w in enumerate(word_list)}
    n_class = len(word_dict)          # 9
    n_hidden = 5
    batch_size = len(sentences)       # 6
    seq_len = 2                       # first two words as input (as in the tutorial)

    # One-hot input batch: (batch, seq, n_class)
    import numpy as np
    X_np = np.zeros((batch_size, seq_len, n_class), dtype=np.float32)
    for b, sen in enumerate(sentences):
        words = sen.split()
        for t in range(seq_len):
            X_np[b, t, word_dict[words[t]]] = 1.0
    X = jnp.asarray(X_np)

    key = jax.random.PRNGKey(0)
    params = init_params(key, n_class, n_hidden)
    hidden = jnp.zeros((1, batch_size, n_hidden), jnp.float32)

    out = textrnn_forward(X, hidden, params)
    out = jax.block_until_ready(out)

    ref = reference_forward(X, hidden, params)
    assert out.shape == (batch_size, n_class)
    assert jnp.allclose(out, ref, atol=1e-5, rtol=1e-5), "mismatch vs reference"

    print("KERNEL_OK")
</pallas_src>

<mosaic_0001>
module attributes {stable_mosaic.version = 11 : i64} {
  func.func @_textrnn_kernel(%arg0: memref<2x6x9xf32, #tpu.memory_space<vmem>>, %arg1: memref<6x5xf32, #tpu.memory_space<vmem>>, %arg2: memref<9x5xf32, #tpu.memory_space<vmem>>, %arg3: memref<5x5xf32, #tpu.memory_space<vmem>>, %arg4: memref<1x5xf32, #tpu.memory_space<vmem>>, %arg5: memref<1x5xf32, #tpu.memory_space<vmem>>, %arg6: memref<5x9xf32, #tpu.memory_space<vmem>>, %arg7: memref<1x9xf32, #tpu.memory_space<vmem>>, %arg8: memref<6x9xf32, #tpu.memory_space<vmem>>) attributes {dimension_semantics = [], scalar_prefetch = 0 : i64, scratch_operands = 0 : i64, tpu.core_type = #tpu.core_type<tc>} {
    %c0 = arith.constant 0 : index
    %c0_0 = arith.constant 0 : index
    %0 = vector.load %arg4[%c0, %c0_0] : memref<1x5xf32, #tpu.memory_space<vmem>>, vector<1x5xf32>
    %c0_1 = arith.constant 0 : index
    %c0_2 = arith.constant 0 : index
    %1 = vector.load %arg5[%c0_1, %c0_2] : memref<1x5xf32, #tpu.memory_space<vmem>>, vector<1x5xf32>
    %2 = arith.addf %0, %1 : vector<1x5xf32>
    %3 = vector.shape_cast %2 : vector<1x5xf32> to vector<1x5xf32>
    %4 = vector.broadcast %3 : vector<1x5xf32> to vector<6x5xf32>
    %c0_3 = arith.constant 0 : index
    %c0_4 = arith.constant 0 : index
    %5 = vector.load %arg2[%c0_3, %c0_4] : memref<9x5xf32, #tpu.memory_space<vmem>>, vector<9x5xf32>
    %c0_5 = arith.constant 0 : index
    %c0_6 = arith.constant 0 : index
    %6 = vector.load %arg3[%c0_5, %c0_6] : memref<5x5xf32, #tpu.memory_space<vmem>>, vector<5x5xf32>
    %c0_7 = arith.constant 0 : index
    %c0_8 = arith.constant 0 : index
    %c0_9 = arith.constant 0 : index
    %7 = vector.load %arg0[%c0_7, %c0_8, %c0_9] : memref<2x6x9xf32, #tpu.memory_space<vmem>>, vector<1x6x9xf32>
    %8 = vector.shape_cast %7 : vector<1x6x9xf32> to vector<6x9xf32>
    %cst = arith.constant dense<0.000000e+00> : vector<6x5xf32>
    %9 = tpu.matmul %8, %5, %cst {dimension_numbers = #tpu.dot_dimension_numbers<[1], [0], [0], [1], [0, 0, 1, 1], [], []>} : vector<6x9xf32>, vector<9x5xf32>, vector<6x5xf32> -> vector<6x5xf32>
    %10 = arith.addf %9, %4 : vector<6x5xf32>
    %c1 = arith.constant 1 : index
    %c0_10 = arith.constant 0 : index
    %c0_11 = arith.constant 0 : index
    %11 = vector.load %arg0[%c1, %c0_10, %c0_11] : memref<2x6x9xf32, #tpu.memory_space<vmem>>, vector<1x6x9xf32>
    %12 = vector.shape_cast %11 : vector<1x6x9xf32> to vector<6x9xf32>
    %cst_12 = arith.constant dense<0.000000e+00> : vector<6x5xf32>
    %13 = tpu.matmul %12, %5, %cst_12 {dimension_numbers = #tpu.dot_dimension_numbers<[1], [0], [0], [1], [0, 0, 1, 1], [], []>} : vector<6x9xf32>, vector<9x5xf32>, vector<6x5xf32> -> vector<6x5xf32>
    %14 = arith.addf %13, %4 : vector<6x5xf32>
    %c0_13 = arith.constant 0 : index
    %c0_14 = arith.constant 0 : index
    %15 = vector.load %arg1[%c0_13, %c0_14] : memref<6x5xf32, #tpu.memory_space<vmem>>, vector<6x5xf32>
    %cst_15 = arith.constant dense<0.000000e+00> : vector<6x5xf32>
    %16 = tpu.matmul %15, %6, %cst_15 {dimension_numbers = #tpu.dot_dimension_numbers<[1], [0], [0], [1], [0, 0, 1, 1], [], []>} : vector<6x5xf32>, vector<5x5xf32>, vector<6x5xf32> -> vector<6x5xf32>
    %17 = arith.addf %10, %16 : vector<6x5xf32>
    %18 = math.tanh %17 : vector<6x5xf32>
    %cst_16 = arith.constant dense<0.000000e+00> : vector<6x5xf32>
    %19 = tpu.matmul %18, %6, %cst_16 {dimension_numbers = #tpu.dot_dimension_numbers<[1], [0], [0], [1], [0, 0, 1, 1], [], []>} : vector<6x5xf32>, vector<5x5xf32>, vector<6x5xf32> -> vector<6x5xf32>
    %20 = arith.addf %14, %19 : vector<6x5xf32>
    %21 = math.tanh %20 : vector<6x5xf32>
    %c0_17 = arith.constant 0 : index
    %c0_18 = arith.constant 0 : index
    %22 = vector.load %arg6[%c0_17, %c0_18] : memref<5x9xf32, #tpu.memory_space<vmem>>, vector<5x9xf32>
    %cst_19 = arith.constant dense<0.000000e+00> : vector<6x9xf32>
    %23 = tpu.matmul %21, %22, %cst_19 {dimension_numbers = #tpu.dot_dimension_numbers<[1], [0], [0], [1], [0, 0, 1, 1], [], []>} : vector<6x5xf32>, vector<5x9xf32>, vector<6x9xf32> -> vector<6x9xf32>
    %c0_20 = arith.constant 0 : index
    %c0_21 = arith.constant 0 : index
    %24 = vector.load %arg7[%c0_20, %c0_21] : memref<1x9xf32, #tpu.memory_space<vmem>>, vector<1x9xf32>
    %25 = vector.broadcast %24 : vector<1x9xf32> to vector<6x9xf32>
    %26 = arith.addf %23, %25 : vector<6x9xf32>
    %c0_22 = arith.constant 0 : index
    %c0_23 = arith.constant 0 : index
    %27 = vector.load %arg8[%c0_22, %c0_23] : memref<6x9xf32, #tpu.memory_space<vmem>>, vector<6x9xf32>
    tpu.vector_store %arg8[%c0_22, %c0_23], %26 {strides = array<i32>} : memref<6x9xf32, #tpu.memory_space<vmem>>, vector<6x9xf32>,
    return
  }
}

</mosaic_0001>

<llo_original>
// kernel: textrnn_forward.1
$region0: #{textrnn_forward.1}
  #allocation0 [shape = 'u32[]', space=smem, size = 0x4, offset = 0x4, fixed_abs, tag = 'smem constant byte address 0x4 - core index']
  #allocation1 [shape = 'u32[144,128]{1,0:T(1,128)}', space=vmem, size = 0x12000, scoped, tag = 'internal scratch']
  %s0 = inlined_call_operand.vmem [shape: f32[2,6,9], index: 0, kind: input, shape index: {}]
  %s1 = inlined_call_operand.vmem [shape: f32[6,5], index: 1, kind: input, shape index: {}]
  %s2 = inlined_call_operand.vmem [shape: f32[9,5], index: 2, kind: input, shape index: {}]
  %s3 = inlined_call_operand.vmem [shape: f32[5,5], index: 3, kind: input, shape index: {}]
  %s4 = inlined_call_operand.vmem [shape: f32[1,5], index: 4, kind: input, shape index: {}]
  %s5 = inlined_call_operand.vmem [shape: f32[1,5], index: 5, kind: input, shape index: {}]
  %s6 = inlined_call_operand.vmem [shape: f32[5,9], index: 6, kind: input, shape index: {}]
  %s7 = inlined_call_operand.vmem [shape: f32[1,9], index: 7, kind: input, shape index: {}]
  %s8 = inlined_call_operand.hbm [shape: f32[6,9], index: 8, kind: output, shape index: {}]
  %s9 = sld [smem:[#allocation0]]
  $region42: #{textrnn_forward.1} parent=0
    _
  %s11 = ssub.s32 1, %s9
  %s12 = scalar_select 0, %s11, %s9
  $region1: #{textrnn_forward.1} parent=0
    #allocation2 [shape = 'u8[4096]{0}', space=vmem, size = 0x1000, scoped, tag = 'output window, operand 0, single buffered']
    #allocation3 [shape = 's32[1]{0}', space=sflag, size = 0x4, scoped, tag = 'scoped memory for textrnn_forward.1']
    %13 = vsyncpa [#allocation3], 0
    // Predicated region
    $region2: #{textrnn_forward.1} parent=1 // pred_check
      _
    $region3: #{textrnn_forward.1} parent=1 // pred_check_branch
      %15 = sbr.rel (0) target = $region5
    $region4: #{textrnn_forward.1} parent=1 // pred_region
      _
    $region5: #{textrnn_forward.1} parent=1 // pred_fallthru
      _
    // Predicated region
    $region6: #{textrnn_forward.1} parent=1 // pred_check
      _
    $region7: #{textrnn_forward.1} parent=1 // pred_check_branch
      %17 = sbr.rel (0) target = $region9
    $region8: #{textrnn_forward.1} parent=1 // pred_region
      _
    $region9: #{textrnn_forward.1} parent=1 // pred_fallthru
      _
    // Predicated region
    $region10: #{textrnn_forward.1} parent=1 // pred_check
      _
    $region11: #{textrnn_forward.1} parent=1 // pred_check_branch
      %19 = sbr.rel (0) target = $region13
    $region12: #{textrnn_forward.1} parent=1 // pred_region
      _
    $region13: #{textrnn_forward.1} parent=1 // pred_fallthru
      _
    // Predicated region
    $region14: #{textrnn_forward.1} parent=1 // pred_check
      _
    $region15: #{textrnn_forward.1} parent=1 // pred_check_branch
      %21 = sbr.rel (0) target = $region17
    $region16: #{textrnn_forward.1} parent=1 // pred_region
      _
    $region17: #{textrnn_forward.1} parent=1 // pred_fallthru
      _
    // Predicated region
    $region18: #{textrnn_forward.1} parent=1 // pred_check
      _
    $region19: #{textrnn_forward.1} parent=1 // pred_check_branch
      %23 = sbr.rel (0) target = $region21
    $region20: #{textrnn_forward.1} parent=1 // pred_region
      _
    $region21: #{textrnn_forward.1} parent=1 // pred_fallthru
      _
    // Predicated region
    $region22: #{textrnn_forward.1} parent=1 // pred_check
      _
    $region23: #{textrnn_forward.1} parent=1 // pred_check_branch
      %25 = sbr.rel (0) target = $region25
    $region24: #{textrnn_forward.1} parent=1 // pred_region
      _
    $region25: #{textrnn_forward.1} parent=1 // pred_fallthru
      _
    // Predicated region
    $region26: #{textrnn_forward.1} parent=1 // pred_check
      _
    $region27: #{textrnn_forward.1} parent=1 // pred_check_branch
      %27 = sbr.rel (0) target = $region29
    $region28: #{textrnn_forward.1} parent=1 // pred_region
      _
    $region29: #{textrnn_forward.1} parent=1 // pred_fallthru
      _
    // Predicated region
    $region30: #{textrnn_forward.1} parent=1 // pred_check
      _
    $region31: #{textrnn_forward.1} parent=1 // pred_check_branch
      %29 = sbr.rel (0) target = $region33
    $region32: #{textrnn_forward.1} parent=1 // pred_region
      _
    $region33: #{textrnn_forward.1} parent=1 // pred_fallthru
      _
    %v30 = vld [vmem:[%s4] sm:$0x1]
    %v31 = vld [vmem:[%s5] sm:$0x1]
    %v32 = vadd.f32 %v30, %v31
    %v34 = vlaneseq
    %v35 = vshrl.u32 %v34, 7
    %v36 = vsub.s32 0, %v35
    %v37 = vrot.slane %v32, %v36
    %v39 = vld [vmem:[%s2] sm:$0xff]
    %v40 = vld [vmem:[%s2 + $0x8] sm:$0x1]
    %v41 = vld [vmem:[%s3] sm:$0x1f]
    %v42 = vld [vmem:[%s0] sm:$0x3f]
    %vm43 = vcmask 72704
    %v45 = vsel %vm43, %v42, 0
    %vm47 = vcmask 1040384
    %v49 = vsel %vm47, %v40, 0
    %51 = vmatprep.subr.mxu0 0.0
    %52 = vmatpush1.msra.mxu0 %v39
    %53 = vmatprep.subr.mxu0 0.0
    %54 = vmatpush1.msra.mxu0 %v49
    %55 = vmatprep.subr.mxu0 0.0
    %56 = vmatpush1.msra.mxu0 0.0
    %57 = vmatprep.subr.mxu0 0.0
    %58 = vmatpush1.msra.mxu0 0.0
    %59 = vmatprep.subr.mxu0 0.0
    %60 = vmatpush1.msra.mxu0 0.0
    %61 = vmatprep.subr.mxu0 0.0
    %62 = vmatpush1.msra.mxu0 0.0
    %63 = vmatprep.subr.mxu0 0.0
    %64 = vmatpush1.msra.mxu0 0.0
    %65 = vmatprep.subr.mxu0 0.0
    %66 = vmatpush1.msra.mxu0 0.0
    %67 = vmatprep.subr.mxu0 0.0
    %68 = vmatpush1.msra.mxu0 0.0
    %69 = vmatprep.subr.mxu0 0.0
    %70 = vmatpush1.msra.mxu0 0.0
    %71 = vmatprep.subr.mxu0 0.0
    %72 = vmatpush1.msra.mxu0 0.0
    %73 = vmatprep.subr.mxu0 0.0
    %74 = vmatpush1.msra.mxu0 0.0
    %75 = vmatprep.subr.mxu0 0.0
    %76 = vmatpush1.msra.mxu0 0.0
    %77 = vmatprep.subr.mxu0 0.0
    %78 = vmatpush1.msra.mxu0 0.0
    %79 = vmatprep.subr.mxu0 0.0
    %80 = vmatpush1.msra.mxu0 0.0
    %81 = vmatprep.subr.mxu0 0.0
    %82 = vmatpush1.msra.mxu0 0.0
    %83 = vmatprep.subr.mxu0 0.0
    %84 = vmatpush1.msra.mxu0 0.0
    %85 = vmatprep.subr.mxu0 0.0
    %86 = vmatpush1.msra.mxu0 0.0
    %87 = vmatprep.subr.mxu0 0.0
    %88 = vmatpush1.msra.mxu0 0.0
    %89 = vmatprep.subr.mxu0 0.0
    %90 = vmatpush1.msra.mxu0 0.0
    %91 = vmatprep.subr.mxu0 0.0
    %92 = vmatpush1.msra.mxu0 0.0
    %93 = vmatprep.subr.mxu0 0.0
    %94 = vmatpush1.msra.mxu0 0.0
    %95 = vmatprep.subr.mxu0 0.0
    %96 = vmatpush1.msra.mxu0 0.0
    %97 = vmatprep.subr.mxu0 0.0
    %98 = vmatpush1.msra.mxu0 0.0
    %99 = vmatprep.subr.mxu0 0.0
    %100 = vmatpush1.msra.mxu0 0.0
    %101 = vmatprep.subr.mxu0 0.0
    %102 = vmatpush1.msra.mxu0 0.0
    %103 = vmatprep.subr.mxu0 0.0
    %104 = vmatpush1.msra.mxu0 0.0
    %105 = vmatprep.subr.mxu0 0.0
    %106 = vmatpush1.msra.mxu0 0.0
    %107 = vmatprep.subr.mxu0 0.0
    %108 = vmatpush1.msra.mxu0 0.0
    %109 = vmatprep.subr.mxu0 0.0
    %110 = vmatpush1.msra.mxu0 0.0
    %111 = vmatprep.subr.mxu0 0.0
    %112 = vmatpush1.msra.mxu0 0.0
    %113 = vmatprep.subr.mxu0 0.0
    %114 = vmatpush1.msra.mxu0 0.0
    %115 = vmatprep.mubr.f32.mxu0 0.0
    %116 = vmatmul.mubr.f32.gmra.mrb[0].mxu0 %v45
    %v117 = vpop.f32.mrb[0].mxu0
    %v118 = vadd.f32 %v37, %v117
    %v119 = vpop.f32.mrb[0].mxu0
    %120 = vdwg.mxu0
    %s121 = scalar_lea.vmem %s0, 8
    %v122 = vld [vmem:[%s121] sm:$0x3f]
    %v124 = vsel %vm43, %v122, 0
    %126 = vmatprep.subr.mxu0 0.0
    %127 = vmatpush1.msra.mxu0 %v39
    %128 = vmatprep.subr.mxu0 0.0
    %129 = vmatpush1.msra.mxu0 %v49
    %130 = vmatprep.subr.mxu0 0.0
    %131 = vmatpush1.msra.mxu0 0.0
    %132 = vmatprep.subr.mxu0 0.0
    %133 = vmatpush1.msra.mxu0 0.0
    %134 = vmatprep.subr.mxu0 0.0
    %135 = vmatpush1.msra.mxu0 0.0
    %136 = vmatprep.subr.mxu0 0.0
    %137 = vmatpush1.msra.mxu0 0.0
    %138 = vmatprep.subr.mxu0 0.0
    %139 = vmatpush1.msra.mxu0 0.0
    %140 = vmatprep.subr.mxu0 0.0
    %141 = vmatpush1.msra.mxu0 0.0
    %142 = vmatprep.subr.mxu0 0.0
    %143 = vmatpush1.msra.mxu0 0.0
    %144 = vmatprep.subr.mxu0 0.0
    %145 = vmatpush1.msra.mxu0 0.0
    %146 = vmatprep.subr.mxu0 0.0
    %147 = vmatpush1.msra.mxu0 0.0
    %148 = vmatprep.subr.mxu0 0.0
    %149 = vmatpush1.msra.mxu0 0.0
    %150 = vmatprep.subr.mxu0 0.0
    %151 = vmatpush1.msra.mxu0 0.0
    %152 = vmatprep.subr.mxu0 0.0
    %153 = vmatpush1.msra.mxu0 0.0
    %154 = vmatprep.subr.mxu0 0.0
    %155 = vmatpush1.msra.mxu0 0.0
    %156 = vmatprep.subr.mxu0 0.0
    %157 = vmatpush1.msra.mxu0 0.0
    %158 = vmatprep.subr.mxu0 0.0
    %159 = vmatpush1.msra.mxu0 0.0
    %160 = vmatprep.subr.mxu0 0.0
    %161 = vmatpush1.msra.mxu0 0.0
    %162 = vmatprep.subr.mxu0 0.0
    %163 = vmatpush1.msra.mxu0 0.0
    %164 = vmatprep.subr.mxu0 0.0
    %165 = vmatpush1.msra.mxu0 0.0
    %166 = vmatprep.subr.mxu0 0.0
    %167 = vmatpush1.msra.mxu0 0.0
    %168 = vmatprep.subr.mxu0 0.0
    %169 = vmatpush1.msra.mxu0 0.0
    %170 = vmatprep.subr.mxu0 0.0
    %171 = vmatpush1.msra.mxu0 0.0
    %172 = vmatprep.subr.mxu0 0.0
    %173 = vmatpush1.msra.mxu0 0.0
    %174 = vmatprep.subr.mxu0 0.0
    %175 = vmatpush1.msra.mxu0 0.0
    %176 = vmatprep.subr.mxu0 0.0
    %177 = vmatpush1.msra.mxu0 0.0
    %178 = vmatprep.subr.mxu0 0.0
    %179 = vmatpush1.msra.mxu0 0.0
    %180 = vmatprep.subr.mxu0 0.0
    %181 = vmatpush1.msra.mxu0 0.0
    %182 = vmatprep.subr.mxu0 0.0
    %183 = vmatpush1.msra.mxu0 0.0
    %184 = vmatprep.subr.mxu0 0.0
    %185 = vmatpush1.msra.mxu0 0.0
    %186 = vmatprep.subr.mxu0 0.0
    %187 = vmatpush1.msra.mxu0 0.0
    %188 = vmatprep.subr.mxu0 0.0
    %189 = vmatpush1.msra.mxu0 0.0
    %190 = vmatprep.mubr.f32.mxu0 0.0
    %191 = vmatmul.mubr.f32.gmra.mrb[0].mxu0 %v124
    %v192 = vpop.f32.mrb[0].mxu0
    %v193 = vadd.f32 %v37, %v192
    %v194 = vpop.f32.mrb[0].mxu0
    %195 = vdwg.mxu0
    %v196 = vld [vmem:[%s1] sm:$0x3f]
    %vm197 = vcmask 39936
    %v199 = vsel %vm197, %v196, 0
    %vm201 = vcmask 1044480
    %v203 = vsel %vm201, %v41, 0
    %205 = vmatprep.subr.mxu0 0.0
    %206 = vmatpush1.msra.mxu0 %v203
    %207 = vmatprep.subr.mxu0 0.0
    %208 = vmatpush1.msra.mxu0 0.0
    %209 = vmatprep.subr.mxu0 0.0
    %210 = vmatpush1.msra.mxu0 0.0
    %211 = vmatprep.subr.mxu0 0.0
    %212 = vmatpush1.msra.mxu0 0.0
    %213 = vmatprep.subr.mxu0 0.0
    %214 = vmatpush1.msra.mxu0 0.0
    %215 = vmatprep.subr.mxu0 0.0
    %216 = vmatpush1.msra.mxu0 0.0
    %217 = vmatprep.subr.mxu0 0.0
    %218 = vmatpush1.msra.mxu0 0.0
    %219 = vmatprep.subr.mxu0 0.0
    %220 = vmatpush1.msra.mxu0 0.0
    %221 = vmatprep.subr.mxu0 0.0
    %222 = vmatpush1.msra.mxu0 0.0
    %223 = vmatprep.subr.mxu0 0.0
    %224 = vmatpush1.msra.mxu0 0.0
    %225 = vmatprep.subr.mxu0 0.0
    %226 = vmatpush1.msra.mxu0 0.0
    %227 = vmatprep.subr.mxu0 0.0
    %228 = vmatpush1.msra.mxu0 0.0
    %229 = vmatprep.subr.mxu0 0.0
    %230 = vmatpush1.msra.mxu0 0.0
    %231 = vmatprep.subr.mxu0 0.0
    %232 = vmatpush1.msra.mxu0 0.0
    %233 = vmatprep.subr.mxu0 0.0
    %234 = vmatpush1.msra.mxu0 0.0
    %235 = vmatprep.subr.mxu0 0.0
    %236 = vmatpush1.msra.mxu0 0.0
    %237 = vmatprep.subr.mxu0 0.0
    %238 = vmatpush1.msra.mxu0 0.0
    %239 = vmatprep.subr.mxu0 0.0
    %240 = vmatpush1.msra.mxu0 0.0
    %241 = vmatprep.subr.mxu0 0.0
    %242 = vmatpush1.msra.mxu0 0.0
    %243 = vmatprep.subr.mxu0 0.0
    %244 = vmatpush1.msra.mxu0 0.0
    %245 = vmatprep.subr.mxu0 0.0
    %246 = vmatpush1.msra.mxu0 0.0
    %247 = vmatprep.subr.mxu0 0.0
    %248 = vmatpush1.msra.mxu0 0.0
    %249 = vmatprep.subr.mxu0 0.0
    %250 = vmatpush1.msra.mxu0 0.0
    %251 = vmatprep.subr.mxu0 0.0
    %252 = vmatpush1.msra.mxu0 0.0
    %253 = vmatprep.subr.mxu0 0.0
    %254 = vmatpush1.msra.mxu0 0.0
    %255 = vmatprep.subr.mxu0 0.0
    %256 = vmatpush1.msra.mxu0 0.0
    %257 = vmatprep.subr.mxu0 0.0
    %258 = vmatpush1.msra.mxu0 0.0
    %259 = vmatprep.subr.mxu0 0.0
    %260 = vmatpush1.msra.mxu0 0.0
    %261 = vmatprep.subr.mxu0 0.0
    %262 = vmatpush1.msra.mxu0 0.0
    %263 = vmatprep.subr.mxu0 0.0
    %264 = vmatpush1.msra.mxu0 0.0
    %265 = vmatprep.subr.mxu0 0.0
    %266 = vmatpush1.msra.mxu0 0.0
    %267 = vmatprep.subr.mxu0 0.0
    %268 = vmatpush1.msra.mxu0 0.0
    %269 = vmatprep.mubr.f32.mxu0 0.0
    %270 = vmatmul.mubr.f32.gmra.mrb[0].mxu0 %v199
    %v271 = vpop.f32.mrb[0].mxu0
    %v272 = vadd.f32 0.0, %v271
    %v273 = vpop.f32.mrb[0].mxu0
    %274 = vdwg.mxu0
    %v275 = vadd.f32 %v118, %v272
    %v276 = vtanh.pop %v275
    %v278 = vsel %vm197, %v276, 0
    %280 = vmatprep.subr.mxu0 0.0
    %281 = vmatpush1.msra.mxu0 %v203
    %282 = vmatprep.subr.mxu0 0.0
    %283 = vmatpush1.msra.mxu0 0.0
    %284 = vmatprep.subr.mxu0 0.0
    %285 = vmatpush1.msra.mxu0 0.0
    %286 = vmatprep.subr.mxu0 0.0
    %287 = vmatpush1.msra.mxu0 0.0
    %288 = vmatprep.subr.mxu0 0.0
    %289 = vmatpush1.msra.mxu0 0.0
    %290 = vmatprep.subr.mxu0 0.0
    %291 = vmatpush1.msra.mxu0 0.0
    %292 = vmatprep.subr.mxu0 0.0
    %293 = vmatpush1.msra.mxu0 0.0
    %294 = vmatprep.subr.mxu0 0.0
    %295 = vmatpush1.msra.mxu0 0.0
    %296 = vmatprep.subr.mxu0 0.0
    %297 = vmatpush1.msra.mxu0 0.0
    %298 = vmatprep.subr.mxu0 0.0
    %299 = vmatpush1.msra.mxu0 0.0
    %300 = vmatprep.subr.mxu0 0.0
    %301 = vmatpush1.msra.mxu0 0.0
    %302 = vmatprep.subr.mxu0 0.0
    %303 = vmatpush1.msra.mxu0 0.0
    %304 = vmatprep.subr.mxu0 0.0
    %305 = vmatpush1.msra.mxu0 0.0
    %306 = vmatprep.subr.mxu0 0.0
    %307 = vmatpush1.msra.mxu0 0.0
    %308 = vmatprep.subr.mxu0 0.0
    %309 = vmatpush1.msra.mxu0 0.0
    %310 = vmatprep.subr.mxu0 0.0
    %311 = vmatpush1.msra.mxu0 0.0
    %312 = vmatprep.subr.mxu0 0.0
    %313 = vmatpush1.msra.mxu0 0.0
    %314 = vmatprep.subr.mxu0 0.0
    %315 = vmatpush1.msra.mxu0 0.0
    %316 = vmatprep.subr.mxu0 0.0
    %317 = vmatpush1.msra.mxu0 0.0
    %318 = vmatprep.subr.mxu0 0.0
    %319 = vmatpush1.msra.mxu0 0.0
    %320 = vmatprep.subr.mxu0 0.0
    %321 = vmatpush1.msra.mxu0 0.0
    %322 = vmatprep.subr.mxu0 0.0
    %323 = vmatpush1.msra.mxu0 0.0
    %324 = vmatprep.subr.mxu0 0.0
    %325 = vmatpush1.msra.mxu0 0.0
    %326 = vmatprep.subr.mxu0 0.0
    %327 = vmatpush1.msra.mxu0 0.0
    %328 = vmatprep.subr.mxu0 0.0
    %329 = vmatpush1.msra.mxu0 0.0
    %330 = vmatprep.subr.mxu0 0.0
    %331 = vmatpush1.msra.mxu0 0.0
    %332 = vmatprep.subr.mxu0 0.0
    %333 = vmatpush1.msra.mxu0 0.0
    %334 = vmatprep.subr.mxu0 0.0
    %335 = vmatpush1.msra.mxu0 0.0
    %336 = vmatprep.subr.mxu0 0.0
    %337 = vmatpush1.msra.mxu0 0.0
    %338 = vmatprep.subr.mxu0 0.0
    %339 = vmatpush1.msra.mxu0 0.0
    %340 = vmatprep.subr.mxu0 0.0
    %341 = vmatpush1.msra.mxu0 0.0
    %342 = vmatprep.subr.mxu0 0.0
    %343 = vmatpush1.msra.mxu0 0.0
    %344 = vmatprep.mubr.f32.mxu0 0.0
    %345 = vmatmul.mubr.f32.gmra.mrb[0].mxu0 %v278
    %v346 = vpop.f32.mrb[0].mxu0
    %v347 = vadd.f32 0.0, %v346
    %v348 = vpop.f32.mrb[0].mxu0
    %349 = vdwg.mxu0
    %v350 = vadd.f32 %v193, %v347
    %v351 = vtanh.pop %v350
    %v352 = vld [vmem:[%s6] sm:$0x1f]
    %v353 = vld [vmem:[%s7] sm:$0x1]
    %v355 = vlaneseq
    %v356 = vshrl.u32 %v355, 7
    %v357 = vsub.s32 0, %v356
    %v358 = vrot.slane %v353, %v357
    %v361 = vsel %vm197, %v351, 0
    %v364 = vsel %vm201, %v352, 0
    %366 = vmatprep.subr.mxu0 0.0
    %367 = vmatpush1.msra.mxu0 %v364
    %368 = vmatprep.subr.mxu0 0.0
    %369 = vmatpush1.msra.mxu0 0.0
    %370 = vmatprep.subr.mxu0 0.0
    %371 = vmatpush1.msra.mxu0 0.0
    %372 = vmatprep.subr.mxu0 0.0
    %373 = vmatpush1.msra.mxu0 0.0
    %374 = vmatprep.subr.mxu0 0.0
    %375 = vmatpush1.msra.mxu0 0.0
    %376 = vmatprep.subr.mxu0 0.0
    %377 = vmatpush1.msra.mxu0 0.0
    %378 = vmatprep.subr.mxu0 0.0
    %379 = vmatpush1.msra.mxu0 0.0
    %380 = vmatprep.subr.mxu0 0.0
    %381 = vmatpush1.msra.mxu0 0.0
    %382 = vmatprep.subr.mxu0 0.0
    %383 = vmatpush1.msra.mxu0 0.0
    %384 = vmatprep.subr.mxu0 0.0
    %385 = vmatpush1.msra.mxu0 0.0
    %386 = vmatprep.subr.mxu0 0.0
    %387 = vmatpush1.msra.mxu0 0.0
    %388 = vmatprep.subr.mxu0 0.0
    %389 = vmatpush1.msra.mxu0 0.0
    %390 = vmatprep.subr.mxu0 0.0
    %391 = vmatpush1.msra.mxu0 0.0
    %392 = vmatprep.subr.mxu0 0.0
    %393 = vmatpush1.msra.mxu0 0.0
    %394 = vmatprep.subr.mxu0 0.0
    %395 = vmatpush1.msra.mxu0 0.0
    %396 = vmatprep.subr.mxu0 0.0
    %397 = vmatpush1.msra.mxu0 0.0
    %398 = vmatprep.subr.mxu0 0.0
    %399 = vmatpush1.msra.mxu0 0.0
    %400 = vmatprep.subr.mxu0 0.0
    %401 = vmatpush1.msra.mxu0 0.0
    %402 = vmatprep.subr.mxu0 0.0
    %403 = vmatpush1.msra.mxu0 0.0
    %404 = vmatprep.subr.mxu0 0.0
    %405 = vmatpush1.msra.mxu0 0.0
    %406 = vmatprep.subr.mxu0 0.0
    %407 = vmatpush1.msra.mxu0 0.0
    %408 = vmatprep.subr.mxu0 0.0
    %409 = vmatpush1.msra.mxu0 0.0
    %410 = vmatprep.subr.mxu0 0.0
    %411 = vmatpush1.msra.mxu0 0.0
    %412 = vmatprep.subr.mxu0 0.0
    %413 = vmatpush1.msra.mxu0 0.0
    %414 = vmatprep.subr.mxu0 0.0
    %415 = vmatpush1.msra.mxu0 0.0
    %416 = vmatprep.subr.mxu0 0.0
    %417 = vmatpush1.msra.mxu0 0.0
    %418 = vmatprep.subr.mxu0 0.0
    %419 = vmatpush1.msra.mxu0 0.0
    %420 = vmatprep.subr.mxu0 0.0
    %421 = vmatpush1.msra.mxu0 0.0
    %422 = vmatprep.subr.mxu0 0.0
    %423 = vmatpush1.msra.mxu0 0.0
    %424 = vmatprep.subr.mxu0 0.0
    %425 = vmatpush1.msra.mxu0 0.0
    %426 = vmatprep.subr.mxu0 0.0
    %427 = vmatpush1.msra.mxu0 0.0
    %428 = vmatprep.subr.mxu0 0.0
    %429 = vmatpush1.msra.mxu0 0.0
    %430 = vmatprep.mubr.f32.mxu0 0.0
    %431 = vmatmul.mubr.f32.gmra.mrb[0].mxu0 %v361
    %v432 = vpop.f32.mrb[0].mxu0
    %v433 = vadd.f32 %v358, %v432
    %v434 = vpop.f32.mrb[0].mxu0
    %435 = vdwg.mxu0
    %vm436 = vcmask 70656
    %437 = vst.msk [vmem:[#allocation2] sm:$0x3f] %vm436, %v433
    // Predicated region
    $region34: #{textrnn_forward.1} parent=1 // pred_check
      _
    $region35: #{textrnn_forward.1} parent=1 // pred_check_branch
      %439 = sbr.rel (0) target = $region37
    $region36: #{textrnn_forward.1} parent=1 // pred_region
      %s441 = ssub.s32 128, 128
      %442 = vsyncadd [#allocation3], %s441
      %s444 = sshll.u32 [#allocation2], 4
      %s445 = int_to_ptr.vmem [resolvable:$true] %s444
      %447 = dma.vmem_to_hbm [thread:$0]  %s445, 128, %s8, [#allocation3]
    $region37: #{textrnn_forward.1} parent=1 // pred_fallthru
      _
    // Predicated region
    $region38: #{textrnn_forward.1} parent=1 // pred_check
      _
    $region39: #{textrnn_forward.1} parent=1 // pred_check_branch
      %449 = sbr.rel (0) target = $region41
    $region40: #{textrnn_forward.1} parent=1 // pred_region
      %450 = dma.done [#allocation3], 128
    $region41: #{textrnn_forward.1} parent=1 // pred_fallthru
      _
    %451 = vsyncpa [#allocation3], 1

</llo_original>
